<compile_context>
chip_gen: v7x
topology: tpu7x:2x2x1
jax: 0.10.0
libtpu: 0.0.40
codegen_flags: <defaults>
</compile_context>

<pallas_src>
import functools

import jax
import jax.numpy as jnp
from jax.experimental import pallas as pl
from jax.experimental.pallas import tpu as pltpu

LANES = 128  # lane-dense output slab width (out_dim + 1 must be <= 128)


def _round_up(x, m):
    return ((x + m - 1) // m) * m


# --------------------------------------------------------------------------
# Kernel: one batch tile -> fused (Linear, ReLU, Linear) for both heads.
# --------------------------------------------------------------------------
def oracle_kernel(obs_ref, w_ref, b_ref, out_ref, *, in_dim):
    obs = obs_ref[...]                              # [TB, in_dim]       bf16
    w1 = w_ref[:in_dim, :]                          # [in_dim, 128]      bf16
    w2 = w_ref[in_dim:in_dim + LANES, :]            # [128, 128]         bf16

    # Layer 1 (both heads at once), f32 accumulation on the MXU.
    h = jnp.dot(obs, w1, preferred_element_type=jnp.float32) + b_ref[0:1, :]
    h = jnp.maximum(h, 0.0)                         # ReLU (VPU, f32)

    # Layer 2: block-diagonal W2 -> [policy | value | zero-pad] slab.
    out = jnp.dot(h.astype(jnp.bfloat16), w2,
                  preferred_element_type=jnp.float32) + b_ref[1:2, :]
    out_ref[...] = out                              # [TB, 128] unmasked stores


# --------------------------------------------------------------------------
# Wrapper
# --------------------------------------------------------------------------
def oracle_forward(obs, w_slab, b_slab, out_dim, *, tile_b=1024):
    """obs: [B, in_dim] f32.  Returns (policy [B, out_dim], value [B, 1])."""
    B, in_dim = obs.shape
    assert w_slab.shape == (in_dim + LANES, LANES)
    assert b_slab.shape == (2, LANES)

    # Batch tiling: tile must be a multiple of 8 (sublane) and not exceed B.
    tile_b = min(tile_b, _round_up(max(B, 1), 8))
    Bp = _round_up(B, tile_b)

    obs_b = obs.astype(jnp.bfloat16)
    if Bp != B:
        obs_b = jnp.pad(obs_b, ((0, Bp - B), (0, 0)))

    grid = (Bp // tile_b,)

    flops = 2 * Bp * (in_dim * LANES + LANES * LANES)
    bytes_accessed = (obs_b.size * 2            # bf16 obs in
                      + Bp * LANES * 4          # f32 output slab out
                      + w_slab.size * 2         # bf16 weights (resident)
                      + b_slab.size * 4)        # f32 biases (resident)

    out = pl.pallas_call(
        functools.partial(oracle_kernel, in_dim=in_dim),
        out_shape=jax.ShapeDtypeStruct((Bp, LANES), jnp.float32),
        grid_spec=pltpu.PrefetchScalarGridSpec(
            num_scalar_prefetch=0,
            grid=grid,
            in_specs=[
                # obs tile marches over the batch.
                pl.BlockSpec((tile_b, in_dim), lambda i: (i, 0)),
                # packed weights / biases: constant index -> VMEM-resident.
                pl.BlockSpec((in_dim + LANES, LANES), lambda i: (0, 0)),
                pl.BlockSpec((2, LANES), lambda i: (0, 0)),
            ],
            out_specs=pl.BlockSpec((tile_b, LANES), lambda i: (i, 0)),
        ),
        compiler_params=pltpu.CompilerParams(
            dimension_semantics=("parallel",)),
        cost_estimate=pl.CostEstimate(
            flops=flops, transcendentals=0, bytes_accessed=bytes_accessed),
    )(obs_b, w_slab, b_slab)

    policy = out[:B, :out_dim]
    value = out[:B, out_dim:out_dim + 1]
    return policy, value


# --------------------------------------------------------------------------
# Parameter init (mimics torch.nn.Linear) and host-side packing
# --------------------------------------------------------------------------
def init_params(key, in_dim, hidden, out_dim):
    def linear(k, fan_in, fan_out):
        kw, kb = jax.random.split(k)
        bound = 1.0 / jnp.sqrt(jnp.float32(fan_in))
        w = jax.random.uniform(kw, (fan_in, fan_out), jnp.float32, -bound, bound)
        b = jax.random.uniform(kb, (1, fan_out), jnp.float32, -bound, bound)
        return w, b

    k1, k2, k3, k4 = jax.random.split(key, 4)
    w1p, b1p = linear(k1, in_dim, hidden)
    w2p, b2p = linear(k2, hidden, out_dim)
    w1v, b1v = linear(k3, in_dim, hidden)
    w2v, b2v = linear(k4, hidden, 1)
    return dict(w1p=w1p, b1p=b1p, w2p=w2p, b2p=b2p,
                w1v=w1v, b1v=b1v, w2v=w2v, b2v=b2v)


def pack_oracle_params(params, in_dim, hidden, out_dim):
    """Pack 8 tensors into (w_slab [in_dim+128,128] bf16, b_slab [2,128] f32)."""
    assert 2 * hidden <= LANES and out_dim + 1 <= LANES

    w1 = jnp.zeros((in_dim, LANES), jnp.float32)
    w1 = w1.at[:, :hidden].set(params["w1p"])
    w1 = w1.at[:, hidden:2 * hidden].set(params["w1v"])

    w2 = jnp.zeros((LANES, LANES), jnp.float32)
    w2 = w2.at[:hidden, :out_dim].set(params["w2p"])
    w2 = w2.at[hidden:2 * hidden, out_dim:out_dim + 1].set(params["w2v"])

    w_slab = jnp.concatenate([w1, w2], axis=0).astype(jnp.bfloat16)

    b1 = jnp.zeros((1, LANES), jnp.float32)
    b1 = b1.at[:, :hidden].set(params["b1p"])
    b1 = b1.at[:, hidden:2 * hidden].set(params["b1v"])

    b2 = jnp.zeros((1, LANES), jnp.float32)
    b2 = b2.at[:, :out_dim].set(params["b2p"])
    b2 = b2.at[:, out_dim:out_dim + 1].set(params["b2v"])

    b_slab = jnp.concatenate([b1, b2], axis=0)
    return w_slab, b_slab


# --------------------------------------------------------------------------
# References
# --------------------------------------------------------------------------
def oracle_ref_packed(obs, w_slab, b_slab, in_dim, out_dim):
    """Pure-JAX reference using the same bf16 packing / f32 accumulation."""
    obs_b = obs.astype(jnp.bfloat16)
    w1 = w_slab[:in_dim, :]
    w2 = w_slab[in_dim:, :]
    h = jnp.dot(obs_b, w1, preferred_element_type=jnp.float32) + b_slab[0:1, :]
    h = jnp.maximum(h, 0.0)
    out = jnp.dot(h.astype(jnp.bfloat16), w2,
                  preferred_element_type=jnp.float32) + b_slab[1:2, :]
    return out[:, :out_dim], out[:, out_dim:out_dim + 1]


def oracle_ref_f32(obs, p):
    """Original full-f32 two-head math (PyTorch semantics)."""
    hp = jnp.maximum(obs @ p["w1p"] + p["b1p"], 0.0)
    policy = hp @ p["w2p"] + p["b2p"]
    hv = jnp.maximum(obs @ p["w1v"] + p["b1v"], 0.0)
    value = hv @ p["w2v"] + p["b2v"]
    return policy, value


if __name__ == "__main__":
    key = jax.random.PRNGKey(0)
    k_obs, k_params = jax.random.split(key)

    B, in_dim, hidden, out_dim = 8, 4, 32, 6   # small shapes
    obs = jax.random.normal(k_obs, (B, in_dim), jnp.float32)
    params = init_params(k_params, in_dim, hidden, out_dim)
    w_slab, b_slab = pack_oracle_params(params, in_dim, hidden, out_dim)

    policy, value = oracle_forward(obs, w_slab, b_slab, out_dim)
    jax.block_until_ready((policy, value))

    assert policy.shape == (B, out_dim) and value.shape == (B, 1)

    # Tight check vs. reference using identical bf16 packing + f32 accumulation.
    p_ref, v_ref = oracle_ref_packed(obs, w_slab, b_slab, in_dim, out_dim)
    assert jnp.allclose(policy, p_ref, atol=1e-3, rtol=1e-3)
    assert jnp.allclose(value, v_ref, atol=1e-3, rtol=1e-3)

    # Loose check vs. original full-f32 two-head math (bf16 rounding only).
    p32, v32 = oracle_ref_f32(obs, params)
    assert jnp.allclose(policy, p32, atol=5e-2, rtol=5e-2)
    assert jnp.allclose(value, v32, atol=5e-2, rtol=5e-2)

    print("KERNEL_OK")
</pallas_src>

<mosaic_0001>
module attributes {stable_mosaic.version = 11 : i64} {
  func.func @oracle_kernel(%arg0: i32, %arg1: memref<8x4xbf16, #tpu.memory_space<vmem>>, %arg2: memref<132x128xbf16, #tpu.memory_space<vmem>>, %arg3: memref<2x128xf32, #tpu.memory_space<vmem>>, %arg4: memref<8x128xf32, #tpu.memory_space<vmem>>) attributes {dimension_semantics = [#tpu.dimension_semantics<parallel>], iteration_bounds = array<i64: 1>, scalar_prefetch = 0 : i64, scratch_operands = 0 : i64, tpu.core_type = #tpu.core_type<tc>, window_params = [{transform_indices = @transform_0, window_bounds = array<i64: 8, 4>}, {pipeline_mode = #tpu.pipeline_mode<synchronous>, transform_indices = @transform_1, window_bounds = array<i64: 132, 128>}, {pipeline_mode = #tpu.pipeline_mode<synchronous>, transform_indices = @transform_2, window_bounds = array<i64: 2, 128>}, {transform_indices = @transform_3, window_bounds = array<i64: 8, 128>}]} {
    %c0 = arith.constant 0 : index
    %c0_0 = arith.constant 0 : index
    %0 = vector.load %arg1[%c0, %c0_0] : memref<8x4xbf16, #tpu.memory_space<vmem>>, vector<8x4xbf16>
    %c0_1 = arith.constant 0 : index
    %c0_2 = arith.constant 0 : index
    %1 = vector.load %arg2[%c0_1, %c0_2] : memref<132x128xbf16, #tpu.memory_space<vmem>>, vector<4x128xbf16>
    %c4 = arith.constant 4 : index
    %c0_3 = arith.constant 0 : index
    %2 = vector.load %arg2[%c4, %c0_3] : memref<132x128xbf16, #tpu.memory_space<vmem>>, vector<128x128xbf16>
    %cst = arith.constant dense<0.000000e+00> : vector<8x128xf32>
    %3 = tpu.matmul %0, %1, %cst {dimension_numbers = #tpu.dot_dimension_numbers<[1], [0], [0], [1], [0, 0, 1, 1], [], []>} : vector<8x4xbf16>, vector<4x128xbf16>, vector<8x128xf32> -> vector<8x128xf32>
    %c0_4 = arith.constant 0 : index
    %c0_5 = arith.constant 0 : index
    %4 = vector.load %arg3[%c0_4, %c0_5] : memref<2x128xf32, #tpu.memory_space<vmem>>, vector<1x128xf32>
    %5 = vector.broadcast %4 : vector<1x128xf32> to vector<8x128xf32>
    %6 = arith.addf %3, %5 : vector<8x128xf32>
    %cst_6 = arith.constant 0.000000e+00 : f32
    %7 = vector.broadcast %cst_6 : f32 to vector<8x128xf32>
    %8 = arith.maximumf %6, %7 : vector<8x128xf32>
    %9 = arith.truncf %8 : vector<8x128xf32> to vector<8x128xbf16>
    %cst_7 = arith.constant dense<0.000000e+00> : vector<8x128xf32>
    %10 = tpu.matmul %9, %2, %cst_7 {dimension_numbers = #tpu.dot_dimension_numbers<[1], [0], [0], [1], [0, 0, 1, 1], [], []>} : vector<8x128xbf16>, vector<128x128xbf16>, vector<8x128xf32> -> vector<8x128xf32>
    %c1 = arith.constant 1 : index
    %c0_8 = arith.constant 0 : index
    %11 = vector.load %arg3[%c1, %c0_8] : memref<2x128xf32, #tpu.memory_space<vmem>>, vector<1x128xf32>
    %12 = vector.broadcast %11 : vector<1x128xf32> to vector<8x128xf32>
    %13 = arith.addf %10, %12 : vector<8x128xf32>
    %c0_9 = arith.constant 0 : index
    %c0_10 = arith.constant 0 : index
    %14 = vector.load %arg4[%c0_9, %c0_10] : memref<8x128xf32, #tpu.memory_space<vmem>>, vector<8x128xf32>
    tpu.vector_store %arg4[%c0_9, %c0_10], %13 {strides = array<i32>} : memref<8x128xf32, #tpu.memory_space<vmem>>, vector<8x128xf32>,
    return
  }
  func.func @transform_0(%arg0: i32) -> (i32, i32) {
    %c0_i32 = arith.constant 0 : i32
    %c0_i32_0 = arith.constant 0 : i32
    return %arg0, %c0_i32 : i32, i32
  }
  func.func @transform_1(%arg0: i32) -> (i32, i32) {
    %c0_i32 = arith.constant 0 : i32
    %c0_i32_0 = arith.constant 0 : i32
    %c0_i32_1 = arith.constant 0 : i32
    return %c0_i32, %c0_i32_0 : i32, i32
  }
  func.func @transform_2(%arg0: i32) -> (i32, i32) {
    %c0_i32 = arith.constant 0 : i32
    %c0_i32_0 = arith.constant 0 : i32
    %c0_i32_1 = arith.constant 0 : i32
    return %c0_i32, %c0_i32_0 : i32, i32
  }
  func.func @transform_3(%arg0: i32) -> (i32, i32) {
    %c0_i32 = arith.constant 0 : i32
    %c0_i32_0 = arith.constant 0 : i32
    return %arg0, %c0_i32 : i32, i32
  }
}

</mosaic_0001>

<llo_original>
// kernel: tpu_custom_call.1
$region0: #{tpu_custom_call.1}
  #allocation0 [shape = 'u32[]', space=smem, size = 0x4, offset = 0x4, fixed_abs, tag = 'smem constant byte address 0x4 - core index']
  #allocation1 [shape = 'u32[144,128]{1,0:T(1,128)}', space=vmem, size = 0x12000, scoped, tag = 'internal scratch']
  %s0 = inlined_call_operand.vmem [shape: bf16[8,4], index: 0, kind: input, shape index: {}]
  %s1 = inlined_call_operand.hbm [shape: bf16[132,128], index: 1, kind: input, shape index: {}]
  %s2 = inlined_call_operand.vmem [shape: f32[2,128], index: 2, kind: input, shape index: {}]
  %s3 = inlined_call_operand.hbm [shape: f32[8,128], index: 3, kind: output, shape index: {}]
  %s4 = sld [smem:[#allocation0]]
  $region26: #{tpu_custom_call.1} parent=0
    _
  %s6 = ssub.s32 1, %s4
  %s7 = scalar_select 0, %s6, %s4
  $region1: #{tpu_custom_call.1} parent=0
    #allocation2 [shape = 'u8[34816]{0}', space=vmem, size = 0x8800, scoped, tag = 'input window, operand 1, single buffered']
    #allocation3 [shape = 's32[1]{0}', space=sflag, size = 0x4, scoped, tag = 'scoped memory for tpu_custom_call.1']
    #allocation4 [shape = 's32[1]{0}', space=sflag, size = 0x4, scoped, tag = 'scoped memory for tpu_custom_call.1']
    #allocation5 [shape = 'u8[4096]{0}', space=vmem, size = 0x1000, scoped, tag = 'output window, operand 0, single buffered']
    %8 = vsyncpa [#allocation3], 0
    %9 = vsyncpa [#allocation4], 0
    // Predicated region
    $region2: #{tpu_custom_call.1} parent=1 // pred_check
      _
    $region3: #{tpu_custom_call.1} parent=1 // pred_check_branch
      %11 = sbr.rel (0) target = $region5
    $region4: #{tpu_custom_call.1} parent=1 // pred_region
      _
    $region5: #{tpu_custom_call.1} parent=1 // pred_fallthru
      _
    // Predicated region
    $region6: #{tpu_custom_call.1} parent=1 // pred_check
      _
    $region7: #{tpu_custom_call.1} parent=1 // pred_check_branch
      %13 = sbr.rel (0) target = $region9
    $region8: #{tpu_custom_call.1} parent=1 // pred_region
      %s15 = ssub.s32 1088, 1088
      %16 = vsyncadd [#allocation3], %s15
      %s17 = sshll.u32 [#allocation2], 4
      %s18 = int_to_ptr.vmem [resolvable:$true] %s17
      %23 = dma.hbm_to_vmem [thread:$0]  %s1, 1088, %s18, [#allocation3], 64, 64, 4
    $region9: #{tpu_custom_call.1} parent=1 // pred_fallthru
      _
    // Predicated region
    $region10: #{tpu_custom_call.1} parent=1 // pred_check
      _
    $region11: #{tpu_custom_call.1} parent=1 // pred_check_branch
      %25 = sbr.rel (0) target = $region13
    $region12: #{tpu_custom_call.1} parent=1 // pred_region
      _
    $region13: #{tpu_custom_call.1} parent=1 // pred_fallthru
      _
    // Predicated region
    $region14: #{tpu_custom_call.1} parent=1 // pred_check
      _
    $region15: #{tpu_custom_call.1} parent=1 // pred_check_branch
      %27 = sbr.rel (0) target = $region17
    $region16: #{tpu_custom_call.1} parent=1 // pred_region
      %28 = dma.done [#allocation3], 1088
    $region17: #{tpu_custom_call.1} parent=1 // pred_fallthru
      _
    %v30 = vld [vmem:[%s0] sm:$0xf]
    %v31 = vld [vmem:[#allocation2] sm:$0x3]
    %v32 = vld [vmem:[#allocation2] sm:$0xc]
    %v33 = vld [vmem:[#allocation2 + $0x4] sm:$0xf]
    %v34 = vld [vmem:[#allocation2 + $0x8] sm:$0xf]
    %v35 = vld [vmem:[#allocation2 + $0xc] sm:$0xf]
    %v36 = vld [vmem:[#allocation2 + $0x10] sm:$0xf]
    %v37 = vld [vmem:[#allocation2 + $0x14] sm:$0xf]
    %v38 = vld [vmem:[#allocation2 + $0x18] sm:$0xf]
    %v39 = vld [vmem:[#allocation2 + $0x1c] sm:$0xf]
    %v40 = vld [vmem:[#allocation2 + $0x20] sm:$0xf]
    %v41 = vld [vmem:[#allocation2 + $0x24] sm:$0xf]
    %v42 = vld [vmem:[#allocation2 + $0x28] sm:$0xf]
    %v43 = vld [vmem:[#allocation2 + $0x2c] sm:$0xf]
    %v44 = vld [vmem:[#allocation2 + $0x30] sm:$0xf]
    %v45 = vld [vmem:[#allocation2 + $0x34] sm:$0xf]
    %v46 = vld [vmem:[#allocation2 + $0x38] sm:$0xf]
    %v47 = vld [vmem:[#allocation2 + $0x3c] sm:$0xf]
    %v48 = vld [vmem:[#allocation2 + $0x40] sm:$0x3]
    %v49 = vld [vmem:[%s2] sm:$0x1]
    %v50 = vlaneseq
    %v51 = vshrl.u32 %v50, 7
    %v52 = vsub.s32 0, %v51
    %v53 = vrot.slane %v49, %v52
    %vm54 = vcmask 31744
    %v56 = vsel %vm54, %v30, 0
    %vm58 = vcmask 1041408
    %v60 = vsel %vm58, %v31, 0
    %62 = vmatprep.subr.bf16.mxu0 0
    %63 = vmatpush1.bf16.msra.mxu0 %v60
    %64 = vmatprep.subr.bf16.mxu0 0
    %65 = vmatpush1.bf16.msra.mxu0 0
    %66 = vmatprep.subr.bf16.mxu0 0
    %67 = vmatpush1.bf16.msra.mxu0 0
    %68 = vmatprep.subr.bf16.mxu0 0
    %69 = vmatpush1.bf16.msra.mxu0 0
    %70 = vmatprep.subr.bf16.mxu0 0
    %71 = vmatpush1.bf16.msra.mxu0 0
    %72 = vmatprep.subr.bf16.mxu0 0
    %73 = vmatpush1.bf16.msra.mxu0 0
    %74 = vmatprep.subr.bf16.mxu0 0
    %75 = vmatpush1.bf16.msra.mxu0 0
    %76 = vmatprep.subr.bf16.mxu0 0
    %77 = vmatpush1.bf16.msra.mxu0 0
    %78 = vmatprep.subr.bf16.mxu0 0
    %79 = vmatpush1.bf16.msra.mxu0 0
    %80 = vmatprep.subr.bf16.mxu0 0
    %81 = vmatpush1.bf16.msra.mxu0 0
    %82 = vmatprep.subr.bf16.mxu0 0
    %83 = vmatpush1.bf16.msra.mxu0 0
    %84 = vmatprep.subr.bf16.mxu0 0
    %85 = vmatpush1.bf16.msra.mxu0 0
    %86 = vmatprep.subr.bf16.mxu0 0
    %87 = vmatpush1.bf16.msra.mxu0 0
    %88 = vmatprep.subr.bf16.mxu0 0
    %89 = vmatpush1.bf16.msra.mxu0 0
    %90 = vmatprep.subr.bf16.mxu0 0
    %91 = vmatpush1.bf16.msra.mxu0 0
    %92 = vmatprep.subr.bf16.mxu0 0
    %93 = vmatpush1.bf16.msra.mxu0 0
    %94 = vmatprep.mubr.bf16.mxu0 0
    %95 = vmatmul.mubr.bf16.gmra.mrb[0].mxu0 %v56
    %v96 = vpop.f32.mrb[0].mxu0
    %v97 = vadd.f32 %v53, %v96
    %v98 = vpop.f32.mrb[0].mxu0
    %v99 = vpop.f32.mrb[0].mxu0
    %v100 = vpop.f32.mrb[0].mxu0
    %101 = vdwg.mxu0
    %v102 = vmax.f32 %v97, 0.0
    %v103 = vpack.c.bf16 %v102, %v102
    %v104 = vld [vmem:[%s2 + $0x1] sm:$0x1]
    %v105 = vlaneseq
    %v106 = vshrl.u32 %v105, 7
    %v107 = vsub.s32 0, %v106
    %v108 = vrot.slane %v104, %v107
    %v126 = vunpack.c.l.b16 %v32
    %v127 = vunpack.c.l.b16 %v33
    %v128 = vunpack.c.l.b16 %v34
    %v129 = vunpack.c.l.b16 %v35
    %v130 = vunpack.c.l.b16 %v36
    %v131 = vunpack.c.l.b16 %v37
    %v132 = vunpack.c.l.b16 %v38
    %v133 = vunpack.c.l.b16 %v39
    %v134 = vunpack.c.l.b16 %v40
    %v135 = vunpack.c.l.b16 %v41
    %v136 = vunpack.c.l.b16 %v42
    %v137 = vunpack.c.l.b16 %v43
    %v138 = vunpack.c.l.b16 %v44
    %v139 = vunpack.c.l.b16 %v45
    %v140 = vunpack.c.l.b16 %v46
    %v141 = vunpack.c.l.b16 %v47
    %v142 = vunpack.c.l.b16 %v48
    %v143 = vpack.c.b16 %v127, %v126
    %v144 = vpack.c.b16 %v129, %v128
    %v145 = vpack.c.b16 %v131, %v130
    %v146 = vpack.c.b16 %v133, %v132
    %v147 = vpack.c.b16 %v135, %v134
    %v148 = vpack.c.b16 %v137, %v136
    %v149 = vpack.c.b16 %v139, %v138
    %v150 = vpack.c.b16 %v141, %v140
    %v151 = vpack.c.b16 %v142, %v142
    %vm152 = vcmask 1045504
    %v153 = vrot.slane %v143, 2
    %v154 = vrot.slane %v144, 2
    %v155 = vsel %vm152, %v153, %v154
    %v156 = vrot.slane %v145, 2
    %v157 = vsel %vm152, %v154, %v156
    %v158 = vrot.slane %v146, 2
    %v159 = vsel %vm152, %v156, %v158
    %v160 = vrot.slane %v147, 2
    %v161 = vsel %vm152, %v158, %v160
    %v162 = vrot.slane %v148, 2
    %v163 = vsel %vm152, %v160, %v162
    %v164 = vrot.slane %v149, 2
    %v165 = vsel %vm152, %v162, %v164
    %v166 = vrot.slane %v150, 2
    %v167 = vsel %vm152, %v164, %v166
    %v168 = vrot.slane %v151, 2
    %v169 = vsel %vm152, %v166, %v168
    %178 = vmatprep.subr.bf16.mxu0 0
    %179 = vmatpush1.bf16.msra.mxu0 %v155
    %180 = vmatprep.subr.bf16.mxu0 0
    %181 = vmatpush1.bf16.msra.mxu0 %v157
    %182 = vmatprep.subr.bf16.mxu0 0
    %183 = vmatpush1.bf16.msra.mxu0 %v159
    %184 = vmatprep.subr.bf16.mxu0 0
    %185 = vmatpush1.bf16.msra.mxu0 %v161
    %186 = vmatprep.subr.bf16.mxu0 0
    %187 = vmatpush1.bf16.msra.mxu0 %v163
    %188 = vmatprep.subr.bf16.mxu0 0
    %189 = vmatpush1.bf16.msra.mxu0 %v165
    %190 = vmatprep.subr.bf16.mxu0 0
    %191 = vmatpush1.bf16.msra.mxu0 %v167
    %192 = vmatprep.subr.bf16.mxu0 0
    %193 = vmatpush1.bf16.msra.mxu0 %v169
    %194 = vmatprep.subr.bf16.mxu0 0
    %195 = vmatpush1.bf16.msra.mxu0 0
    %196 = vmatprep.subr.bf16.mxu0 0
    %197 = vmatpush1.bf16.msra.mxu0 0
    %198 = vmatprep.subr.bf16.mxu0 0
    %199 = vmatpush1.bf16.msra.mxu0 0
    %200 = vmatprep.subr.bf16.mxu0 0
    %201 = vmatpush1.bf16.msra.mxu0 0
    %202 = vmatprep.subr.bf16.mxu0 0
    %203 = vmatpush1.bf16.msra.mxu0 0
    %204 = vmatprep.subr.bf16.mxu0 0
    %205 = vmatpush1.bf16.msra.mxu0 0
    %206 = vmatprep.subr.bf16.mxu0 0
    %207 = vmatpush1.bf16.msra.mxu0 0
    %208 = vmatprep.subr.bf16.mxu0 0
    %209 = vmatpush1.bf16.msra.mxu0 0
    %210 = vmatprep.mubr.bf16.mxu0 0
    %211 = vmatmul.mubr.bf16.gmra.mrb[0].mxu0 %v103
    %v212 = vpop.f32.mrb[0].mxu0
    %v213 = vadd.f32 %v108, %v212
    %v214 = vpop.f32.mrb[0].mxu0
    %v215 = vpop.f32.mrb[0].mxu0
    %v216 = vpop.f32.mrb[0].mxu0
    %217 = vdwg.mxu0
    %218 = vst [vmem:[#allocation5] sm:$0xff] %v213
    // Predicated region
    $region18: #{tpu_custom_call.1} parent=1 // pred_check
      _
    $region19: #{tpu_custom_call.1} parent=1 // pred_check_branch
      %220 = sbr.rel (0) target = $region21
    $region20: #{tpu_custom_call.1} parent=1 // pred_region
      %s222 = ssub.s32 128, 128
      %223 = vsyncadd [#allocation4], %s222
      %s225 = sshll.u32 [#allocation5], 4
      %s226 = int_to_ptr.vmem [resolvable:$true] %s225
      %228 = dma.vmem_to_hbm [thread:$0]  %s226, 128, %s3, [#allocation4]
    $region21: #{tpu_custom_call.1} parent=1 // pred_fallthru
      _
    // Predicated region
    $region22: #{tpu_custom_call.1} parent=1 // pred_check
      _
    $region23: #{tpu_custom_call.1} parent=1 // pred_check_branch
      %230 = sbr.rel (0) target = $region25
    $region24: #{tpu_custom_call.1} parent=1 // pred_region
      %231 = dma.done [#allocation4], 128
    $region25: #{tpu_custom_call.1} parent=1 // pred_fallthru
      _
    %232 = vsyncpa [#allocation3], 1
    %233 = vsyncpa [#allocation4], 1

</llo_original>
